<compile_context>
chip_gen: v7x
topology: tpu7x:2x2x1
jax: 0.10.0
libtpu: 0.0.40
codegen_flags: <defaults>
</compile_context>

<pallas_src>
import functools

import jax
import jax.numpy as jnp
from jax.experimental import pallas as pl
from jax.experimental.pallas import tpu as pltpu


def _iou_loss_kernel(box_ref, w_ref, out_ref, *, loss_type, block_rows):
    # Per-coordinate slabs, each a vreg-dense (TR, 128) tile.
    pred_left   = box_ref[0]
    pred_top    = box_ref[1]
    pred_right  = box_ref[2]
    pred_bottom = box_ref[3]
    tgt_left    = box_ref[4]
    tgt_top     = box_ref[5]
    tgt_right   = box_ref[6]
    tgt_bottom  = box_ref[7]

    target_area = (tgt_left + tgt_right) * (tgt_top + tgt_bottom)
    pred_area = (pred_left + pred_right) * (pred_top + pred_bottom)

    w_intersect = jnp.minimum(pred_left, tgt_left) + jnp.minimum(pred_right, tgt_right)
    g_w_intersect = jnp.maximum(pred_left, tgt_left) + jnp.maximum(pred_right, tgt_right)
    h_intersect = jnp.minimum(pred_bottom, tgt_bottom) + jnp.minimum(pred_top, tgt_top)
    g_h_intersect = jnp.maximum(pred_bottom, tgt_bottom) + jnp.maximum(pred_top, tgt_top)

    ac_union = g_w_intersect * g_h_intersect + 1e-7
    area_intersect = w_intersect * h_intersect
    area_union = target_area + pred_area - area_intersect

    ious = (area_intersect + 1.0) / (area_union + 1.0)
    gious = ious - (ac_union - area_union) / ac_union

    if loss_type == 'iou':
        losses = -jnp.log(ious)
    elif loss_type == 'linear_iou':
        losses = 1.0 - ious
    elif loss_type == 'giou':
        losses = 1.0 - gious
    else:
        raise NotImplementedError(loss_type)

    # Fused weight stream already encodes: user weight, the weight.sum()>0
    # branch, and zero for padded boxes (padding produces finite losses, so
    # multiplying by 0 is exact).
    prod = losses * w_ref[...]                             # (TR, 128)

    # VPU-only tree reduction to a single lane-dense (8, 128) partial-sum
    # vreg; static, vreg-aligned slices -> no XLU cross-lane reduce per step,
    # and a log-depth add chain instead of a serial one.
    parts = [prod[s * 8:(s + 1) * 8, :] for s in range(block_rows // 8)]
    while len(parts) > 1:
        nxt = []
        for i in range(0, len(parts) - 1, 2):
            nxt.append(parts[i] + parts[i + 1])
        if len(parts) % 2 == 1:
            nxt.append(parts[-1])
        parts = nxt
    out_ref[0] = parts[0]


def iou_loss(pred, target, weight=None, loss_type='iou', block_rows=512):
    """pred, target: (N, 4) float; weight: optional (N,). Returns scalar loss."""
    pred = pred.astype(jnp.float32)
    target = target.astype(jnp.float32)
    n = pred.shape[0]

    block_rows = max(8, (block_rows // 8) * 8)             # multiple of 8 sublanes
    rows = max(1, -(-n // 128))                            # ceil(N / 128)
    tr = min(block_rows, ((rows + 7) // 8) * 8)            # rows per grid step
    rows_pad = ((rows + tr - 1) // tr) * tr
    n_pad = rows_pad * 128
    g = rows_pad // tr

    # Fused (8, R, 128) box stream: sublanes 0-3 = pred, 4-7 = target.
    boxes = jnp.concatenate([pred, target], axis=1)        # (N, 8)
    boxes = jnp.pad(boxes, ((0, n_pad - n), (0, 0)))       # zero padding is benign
    boxes = boxes.T.reshape(8, rows_pad, 128)

    # Effective per-box weight: resolves the `weight.sum() > 0` branch of the
    # PyTorch module and folds in the padding mask (padded boxes -> 0).
    if weight is None:
        w_eff = jnp.ones((n,), jnp.float32)
    else:
        weight = weight.astype(jnp.float32)
        w_eff = jnp.where(jnp.sum(weight) > 0, weight, jnp.ones((n,), jnp.float32))
    w_eff = jnp.pad(w_eff, (0, n_pad - n)).reshape(rows_pad, 128)

    kernel = functools.partial(_iou_loss_kernel, loss_type=loss_type,
                               block_rows=tr)
    partials = pl.pallas_call(
        kernel,
        out_shape=jax.ShapeDtypeStruct((g, 8, 128), jnp.float32),
        grid_spec=pltpu.PrefetchScalarGridSpec(
            num_scalar_prefetch=0,
            grid=(g,),
            in_specs=[
                pl.BlockSpec((8, tr, 128), lambda i: (0, i, 0)),
                pl.BlockSpec((tr, 128), lambda i: (i, 0)),
            ],
            out_specs=pl.BlockSpec((1, 8, 128), lambda i: (i, 0, 0)),
        ),
        compiler_params=pltpu.CompilerParams(
            dimension_semantics=("parallel",)),
    )(boxes, w_eff)

    # Tiny (G, 8, 128) partial tensor -> scalar in the wrapper.
    return jnp.sum(partials)


def _iou_loss_ref(pred, target, weight=None, loss_type='iou'):
    """Pure-JAX reference mirroring the PyTorch module (for verification)."""
    p_l, p_t, p_r, p_b = pred[:, 0], pred[:, 1], pred[:, 2], pred[:, 3]
    t_l, t_t, t_r, t_b = target[:, 0], target[:, 1], target[:, 2], target[:, 3]
    target_area = (t_l + t_r) * (t_t + t_b)
    pred_area = (p_l + p_r) * (p_t + p_b)
    w_i = jnp.minimum(p_l, t_l) + jnp.minimum(p_r, t_r)
    g_w = jnp.maximum(p_l, t_l) + jnp.maximum(p_r, t_r)
    h_i = jnp.minimum(p_b, t_b) + jnp.minimum(p_t, t_t)
    g_h = jnp.maximum(p_b, t_b) + jnp.maximum(p_t, t_t)
    ac = g_w * g_h + 1e-7
    a_i = w_i * h_i
    a_u = target_area + pred_area - a_i
    ious = (a_i + 1.0) / (a_u + 1.0)
    gious = ious - (ac - a_u) / ac
    if loss_type == 'iou':
        losses = -jnp.log(ious)
    elif loss_type == 'linear_iou':
        losses = 1.0 - ious
    elif loss_type == 'giou':
        losses = 1.0 - gious
    else:
        raise NotImplementedError
    if weight is not None:
        return jnp.where(jnp.sum(weight) > 0,
                         jnp.sum(losses * weight), jnp.sum(losses))
    return jnp.sum(losses)


if __name__ == "__main__":
    key = jax.random.PRNGKey(0)
    ok = True
    # (N=8, default block)  : single grid step, heavy lane padding inside block.
    # (N=3000, block_rows=8): 3 grid steps -> exercises the parallel grid axis
    #                         and partial-sum combination.
    for n, blk in ((8, 512), (3000, 8)):
        kp, kt, kw = jax.random.split(jax.random.fold_in(key, n), 3)
        pred = jax.random.uniform(kp, (n, 4), jnp.float32, minval=0.5, maxval=10.0)
        target = jax.random.uniform(kt, (n, 4), jnp.float32, minval=0.5, maxval=10.0)
        weight = jax.random.uniform(kw, (n,), jnp.float32)
        for lt in ('iou', 'linear_iou', 'giou'):
            for w in (None, weight, jnp.zeros((n,), jnp.float32)):
                out = jax.block_until_ready(
                    iou_loss(pred, target, w, lt, block_rows=blk))
                ref = _iou_loss_ref(pred, target, w, lt)
                if not jnp.allclose(out, ref, rtol=1e-4, atol=1e-4):
                    ok = False
                    print(f"MISMATCH n={n} loss_type={lt} "
                          f"weight={'None' if w is None else 'array'}: "
                          f"{out} vs {ref}")
    if ok:
        print("KERNEL_OK")
</pallas_src>

<mosaic_0001>
module attributes {stable_mosaic.version = 11 : i64} {
  func.func @_iou_loss_kernel(%arg0: i32, %arg1: memref<8x8x128xf32, #tpu.memory_space<vmem>>, %arg2: memref<8x128xf32, #tpu.memory_space<vmem>>, %arg3: memref<1x8x128xf32, #tpu.memory_space<vmem>>) attributes {dimension_semantics = [#tpu.dimension_semantics<parallel>], iteration_bounds = array<i64: 1>, scalar_prefetch = 0 : i64, scratch_operands = 0 : i64, tpu.core_type = #tpu.core_type<tc>, window_params = [{transform_indices = @transform_0, window_bounds = array<i64: 8, 8, 128>}, {transform_indices = @transform_1, window_bounds = array<i64: 8, 128>}, {transform_indices = @transform_2, window_bounds = array<i64: 1, 8, 128>}]} {
    %c0 = arith.constant 0 : index
    %c0_0 = arith.constant 0 : index
    %c0_1 = arith.constant 0 : index
    %0 = vector.load %arg1[%c0, %c0_0, %c0_1] : memref<8x8x128xf32, #tpu.memory_space<vmem>>, vector<1x8x128xf32>
    %1 = vector.shape_cast %0 : vector<1x8x128xf32> to vector<8x128xf32>
    %c1 = arith.constant 1 : index
    %c0_2 = arith.constant 0 : index
    %c0_3 = arith.constant 0 : index
    %2 = vector.load %arg1[%c1, %c0_2, %c0_3] : memref<8x8x128xf32, #tpu.memory_space<vmem>>, vector<1x8x128xf32>
    %3 = vector.shape_cast %2 : vector<1x8x128xf32> to vector<8x128xf32>
    %c2 = arith.constant 2 : index
    %c0_4 = arith.constant 0 : index
    %c0_5 = arith.constant 0 : index
    %4 = vector.load %arg1[%c2, %c0_4, %c0_5] : memref<8x8x128xf32, #tpu.memory_space<vmem>>, vector<1x8x128xf32>
    %5 = vector.shape_cast %4 : vector<1x8x128xf32> to vector<8x128xf32>
    %c3 = arith.constant 3 : index
    %c0_6 = arith.constant 0 : index
    %c0_7 = arith.constant 0 : index
    %6 = vector.load %arg1[%c3, %c0_6, %c0_7] : memref<8x8x128xf32, #tpu.memory_space<vmem>>, vector<1x8x128xf32>
    %7 = vector.shape_cast %6 : vector<1x8x128xf32> to vector<8x128xf32>
    %c4 = arith.constant 4 : index
    %c0_8 = arith.constant 0 : index
    %c0_9 = arith.constant 0 : index
    %8 = vector.load %arg1[%c4, %c0_8, %c0_9] : memref<8x8x128xf32, #tpu.memory_space<vmem>>, vector<1x8x128xf32>
    %9 = vector.shape_cast %8 : vector<1x8x128xf32> to vector<8x128xf32>
    %c5 = arith.constant 5 : index
    %c0_10 = arith.constant 0 : index
    %c0_11 = arith.constant 0 : index
    %10 = vector.load %arg1[%c5, %c0_10, %c0_11] : memref<8x8x128xf32, #tpu.memory_space<vmem>>, vector<1x8x128xf32>
    %11 = vector.shape_cast %10 : vector<1x8x128xf32> to vector<8x128xf32>
    %c6 = arith.constant 6 : index
    %c0_12 = arith.constant 0 : index
    %c0_13 = arith.constant 0 : index
    %12 = vector.load %arg1[%c6, %c0_12, %c0_13] : memref<8x8x128xf32, #tpu.memory_space<vmem>>, vector<1x8x128xf32>
    %13 = vector.shape_cast %12 : vector<1x8x128xf32> to vector<8x128xf32>
    %c7 = arith.constant 7 : index
    %c0_14 = arith.constant 0 : index
    %c0_15 = arith.constant 0 : index
    %14 = vector.load %arg1[%c7, %c0_14, %c0_15] : memref<8x8x128xf32, #tpu.memory_space<vmem>>, vector<1x8x128xf32>
    %15 = vector.shape_cast %14 : vector<1x8x128xf32> to vector<8x128xf32>
    %16 = arith.addf %9, %13 : vector<8x128xf32>
    %17 = arith.addf %11, %15 : vector<8x128xf32>
    %18 = arith.mulf %16, %17 : vector<8x128xf32>
    %19 = arith.addf %1, %5 : vector<8x128xf32>
    %20 = arith.addf %3, %7 : vector<8x128xf32>
    %21 = arith.mulf %19, %20 : vector<8x128xf32>
    %22 = arith.minimumf %1, %9 : vector<8x128xf32>
    %23 = arith.minimumf %5, %13 : vector<8x128xf32>
    %24 = arith.addf %22, %23 : vector<8x128xf32>
    %25 = arith.minimumf %7, %15 : vector<8x128xf32>
    %26 = arith.minimumf %3, %11 : vector<8x128xf32>
    %27 = arith.addf %25, %26 : vector<8x128xf32>
    %28 = arith.mulf %24, %27 : vector<8x128xf32>
    %29 = arith.addf %18, %21 : vector<8x128xf32>
    %30 = arith.subf %29, %28 : vector<8x128xf32>
    %cst = arith.constant 1.000000e+00 : f32
    %31 = vector.broadcast %cst : f32 to vector<8x128xf32>
    %32 = arith.addf %28, %31 : vector<8x128xf32>
    %cst_16 = arith.constant 1.000000e+00 : f32
    %33 = vector.broadcast %cst_16 : f32 to vector<8x128xf32>
    %34 = arith.addf %30, %33 : vector<8x128xf32>
    %35 = arith.divf %32, %34 : vector<8x128xf32>
    %36 = math.log %35 : vector<8x128xf32>
    %cst_17 = arith.constant 0.000000e+00 : f32
    %37 = vector.broadcast %cst_17 : f32 to vector<8x128xf32>
    %38 = arith.subf %37, %36 : vector<8x128xf32>
    %c0_18 = arith.constant 0 : index
    %c0_19 = arith.constant 0 : index
    %39 = vector.load %arg2[%c0_18, %c0_19] : memref<8x128xf32, #tpu.memory_space<vmem>>, vector<8x128xf32>
    %40 = arith.mulf %38, %39 : vector<8x128xf32>
    %c0_20 = arith.constant 0 : index
    %c0_21 = arith.constant 0 : index
    %c0_22 = arith.constant 0 : index
    %41 = vector.load %arg3[%c0_20, %c0_21, %c0_22] : memref<1x8x128xf32, #tpu.memory_space<vmem>>, vector<1x8x128xf32>
    %42 = vector.shape_cast %41 : vector<1x8x128xf32> to vector<8x128xf32>
    %43 = vector.shape_cast %40 : vector<8x128xf32> to vector<1x8x128xf32>
    tpu.vector_store %arg3[%c0_20, %c0_21, %c0_22], %43 {strides = array<i32>} : memref<1x8x128xf32, #tpu.memory_space<vmem>>, vector<1x8x128xf32>,
    return
  }
  func.func @transform_0(%arg0: i32) -> (i32, i32, i32) {
    %c0_i32 = arith.constant 0 : i32
    %c0_i32_0 = arith.constant 0 : i32
    %c0_i32_1 = arith.constant 0 : i32
    return %c0_i32, %arg0, %c0_i32_0 : i32, i32, i32
  }
  func.func @transform_1(%arg0: i32) -> (i32, i32) {
    %c0_i32 = arith.constant 0 : i32
    %c0_i32_0 = arith.constant 0 : i32
    return %arg0, %c0_i32 : i32, i32
  }
  func.func @transform_2(%arg0: i32) -> (i32, i32, i32) {
    %c0_i32 = arith.constant 0 : i32
    %c0_i32_0 = arith.constant 0 : i32
    %c0_i32_1 = arith.constant 0 : i32
    return %arg0, %c0_i32, %c0_i32_0 : i32, i32, i32
  }
}

</mosaic_0001>

<llo_original>
// kernel: tpu_custom_call.1
$region0: #{tpu_custom_call.1}
  #allocation0 [shape = 'u32[]', space=smem, size = 0x4, offset = 0x4, fixed_abs, tag = 'smem constant byte address 0x4 - core index']
  #allocation1 [shape = 'u32[144,128]{1,0:T(1,128)}', space=vmem, size = 0x12000, scoped, tag = 'internal scratch']
  %s0 = inlined_call_operand.hbm [shape: f32[8,8,128], index: 0, kind: input, shape index: {}]
  %s1 = inlined_call_operand.hbm [shape: f32[8,128], index: 1, kind: input, shape index: {}]
  %s2 = inlined_call_operand.hbm [shape: f32[1,8,128], index: 2, kind: output, shape index: {}]
  %s3 = sld [smem:[#allocation0]]
  $region26: #{tpu_custom_call.1} parent=0
    _
  %s5 = ssub.s32 1, %s3
  %s6 = scalar_select 0, %s5, %s3
  $region1: #{tpu_custom_call.1} parent=0
    #allocation2 [shape = 'u8[32768]{0}', space=vmem, size = 0x8000, scoped, tag = 'input window, operand 0, single buffered']
    #allocation3 [shape = 's32[1]{0}', space=sflag, size = 0x4, scoped, tag = 'scoped memory for tpu_custom_call.1']
    #allocation4 [shape = 's32[1]{0}', space=sflag, size = 0x4, scoped, tag = 'scoped memory for tpu_custom_call.1']
    #allocation5 [shape = 'u8[4096]{0}', space=vmem, size = 0x1000, scoped, tag = 'input window, operand 1, single buffered']
    #allocation6 [shape = 's32[1]{0}', space=sflag, size = 0x4, scoped, tag = 'scoped memory for tpu_custom_call.1']
    #allocation7 [shape = 'u8[4096]{0}', space=vmem, size = 0x1000, scoped, tag = 'output window, operand 0, single buffered']
    %7 = vsyncpa [#allocation3], 0
    %8 = vsyncpa [#allocation6], 0
    %9 = vsyncpa [#allocation4], 0
    // Predicated region
    $region2: #{tpu_custom_call.1} parent=1 // pred_check
      _
    $region3: #{tpu_custom_call.1} parent=1 // pred_check_branch
      %11 = sbr.rel (0) target = $region5
    $region4: #{tpu_custom_call.1} parent=1 // pred_region
      %s13 = ssub.s32 1024, 1024
      %14 = vsyncadd [#allocation3], %s13
      %s15 = sshll.u32 [#allocation2], 4
      %s16 = int_to_ptr.vmem [resolvable:$true] %s15
      %21 = dma.hbm_to_vmem [thread:$0]  %s0, 1024, %s16, [#allocation3], 128, 128, 8
    $region5: #{tpu_custom_call.1} parent=1 // pred_fallthru
      _
    // Predicated region
    $region6: #{tpu_custom_call.1} parent=1 // pred_check
      _
    $region7: #{tpu_custom_call.1} parent=1 // pred_check_branch
      %23 = sbr.rel (0) target = $region9
    $region8: #{tpu_custom_call.1} parent=1 // pred_region
      %s25 = ssub.s32 128, 128
      %26 = vsyncadd [#allocation6], %s25
      %s28 = sshll.u32 [#allocation5], 4
      %s29 = int_to_ptr.vmem [resolvable:$true] %s28
      %31 = dma.hbm_to_vmem [thread:$0]  %s1, 128, %s29, [#allocation6]
    $region9: #{tpu_custom_call.1} parent=1 // pred_fallthru
      _
    // Predicated region
    $region10: #{tpu_custom_call.1} parent=1 // pred_check
      _
    $region11: #{tpu_custom_call.1} parent=1 // pred_check_branch
      %33 = sbr.rel (0) target = $region13
    $region12: #{tpu_custom_call.1} parent=1 // pred_region
      %34 = dma.done [#allocation3], 1024
    $region13: #{tpu_custom_call.1} parent=1 // pred_fallthru
      _
    // Predicated region
    $region14: #{tpu_custom_call.1} parent=1 // pred_check
      _
    $region15: #{tpu_custom_call.1} parent=1 // pred_check_branch
      %36 = sbr.rel (0) target = $region17
    $region16: #{tpu_custom_call.1} parent=1 // pred_region
      %37 = dma.done [#allocation6], 128
    $region17: #{tpu_custom_call.1} parent=1 // pred_fallthru
      _
    %v38 = vld [vmem:[#allocation2] sm:$0xff]
    %s39 = scalar_lea.vmem [#allocation2], 8
    %v40 = vld [vmem:[%s39] sm:$0xff]
    %s41 = scalar_lea.vmem [#allocation2], 16
    %v42 = vld [vmem:[%s41] sm:$0xff]
    %s43 = scalar_lea.vmem [#allocation2], 24
    %v44 = vld [vmem:[%s43] sm:$0xff]
    %s45 = scalar_lea.vmem [#allocation2], 32
    %v46 = vld [vmem:[%s45] sm:$0xff]
    %s47 = scalar_lea.vmem [#allocation2], 40
    %v48 = vld [vmem:[%s47] sm:$0xff]
    %s49 = scalar_lea.vmem [#allocation2], 48
    %v50 = vld [vmem:[%s49] sm:$0xff]
    %s51 = scalar_lea.vmem [#allocation2], 56
    %v52 = vld [vmem:[%s51] sm:$0xff]
    %v53 = vadd.f32 %v46, %v50
    %v54 = vadd.f32 %v48, %v52
    %v55 = vmul.f32 %v53, %v54
    %v56 = vadd.f32 %v38, %v42
    %v57 = vadd.f32 %v40, %v44
    %v58 = vmul.f32 %v56, %v57
    %v59 = vmin.f32 %v38, %v46
    %v60 = vmin.f32 %v42, %v50
    %v61 = vadd.f32 %v59, %v60
    %v62 = vmin.f32 %v44, %v52
    %v63 = vmin.f32 %v40, %v48
    %v64 = vadd.f32 %v62, %v63
    %v65 = vmul.f32 %v61, %v64
    %v66 = vadd.f32 %v55, %v58
    %v67 = vsub.f32 %v66, %v65
    %v68 = vadd.f32 %v65, 1.0
    %v69 = vadd.f32 %v67, 1.0
    %v70 = vrcp.pop %v69
    %v71 = vmul.f32 %v68, %v70
    %v72 = vlog2.pop %v71
    %v73 = vmul.f32 %v72, 0.6931472
    %v74 = vsub.f32 0.0, %v73
    %v75 = vld [vmem:[#allocation5] sm:$0xff]
    %v76 = vmul.f32 %v74, %v75
    %77 = vst [vmem:[#allocation7] sm:$0xff] %v76
    // Predicated region
    $region18: #{tpu_custom_call.1} parent=1 // pred_check
      _
    $region19: #{tpu_custom_call.1} parent=1 // pred_check_branch
      %79 = sbr.rel (0) target = $region21
    $region20: #{tpu_custom_call.1} parent=1 // pred_region
      %s81 = ssub.s32 128, 128
      %82 = vsyncadd [#allocation4], %s81
      %s84 = sshll.u32 [#allocation7], 4
      %s85 = int_to_ptr.vmem [resolvable:$true] %s84
      %87 = dma.vmem_to_hbm [thread:$0]  %s85, 128, %s2, [#allocation4]
    $region21: #{tpu_custom_call.1} parent=1 // pred_fallthru
      _
    // Predicated region
    $region22: #{tpu_custom_call.1} parent=1 // pred_check
      _
    $region23: #{tpu_custom_call.1} parent=1 // pred_check_branch
      %89 = sbr.rel (0) target = $region25
    $region24: #{tpu_custom_call.1} parent=1 // pred_region
      %90 = dma.done [#allocation4], 128
    $region25: #{tpu_custom_call.1} parent=1 // pred_fallthru
      _
    %91 = vsyncpa [#allocation3], 1
    %92 = vsyncpa [#allocation6], 1
    %93 = vsyncpa [#allocation4], 1

</llo_original>
